<compile_context>
chip_gen: v7x
topology: tpu7x:2x2x1
jax: 0.10.0
libtpu: 0.0.40
codegen_flags: <defaults>
</compile_context>

<pallas_src>
import jax
import jax.numpy as jnp
from jax.experimental import pallas as pl
from jax.experimental.pallas import tpu as pltpu


def _make_gs_kernel(n_models):
    """Build the Gram-Schmidt kernel for a static number of models."""

    def _normalize(w):
        ss = jnp.sum(w * w, axis=-1, keepdims=True)          # [tile_s, 1]
        inv = jnp.where(ss > 0.0, jax.lax.rsqrt(ss), 0.0)    # EUP rsqrt, NaN-free
        return w * inv

    def kernel(x_ref, o_ref, basis_ref):
        # x_ref / o_ref: [n_models, tile_s, dim]; basis_ref: [n_models-1, tile_s, dim] f32
        b0 = _normalize(x_ref[0, :, :].astype(jnp.float32))
        o_ref[0, :, :] = b0.astype(o_ref.dtype)
        if n_models > 1:
            basis_ref[0, :, :] = b0

        # n_models is small & static -> unrolled Python loop (traced once).
        for i in range(1, n_models):
            v = x_ref[i, :, :].astype(jnp.float32)            # [tile_s, dim]
            prev = basis_ref[pl.ds(0, i), :, :]               # [i, tile_s, dim] (static i)
            # Classical GS: coefficients against the ORIGINAL v (matches PyTorch ref).
            coeffs = jnp.sum(v[None, :, :] * prev, axis=-1, keepdims=True)  # [i, tile_s, 1]
            proj = jnp.sum(coeffs * prev, axis=0)             # [tile_s, dim]
            w = _normalize(v - proj)
            o_ref[i, :, :] = w.astype(o_ref.dtype)
            if i < n_models - 1:                              # last basis is never re-read
                basis_ref[i, :, :] = w

    return kernel


def _round_up(v, m):
    return ((v + m - 1) // m) * m


def _working_set_bytes(n_models, dim, tile, itemsize):
    block = n_models * tile * dim * itemsize                  # one in OR out block
    scratch = max(n_models - 1, 1) * tile * dim * 4           # f32 basis scratch
    temps = (n_models + 2) * tile * dim * 4                   # live f32 intermediates
    return 4 * block + scratch + temps                        # in+out, double-buffered


def _default_tile_target():
    # Per-generation starting point; the VMEM budget below is the hard constraint.
    try:
        kind = jax.devices()[0].device_kind.lower()
    except Exception:
        return 1024
    if "v5 lite" in kind or "v5e" in kind:
        return 512        # v5e: keep vreg / vst pressure low
    if "v6" in kind:
        return 2048       # v6e: 128 MiB VMEM, amortize per-grid-step overhead
    return 1024           # v7x and others: conservative (64 MiB VMEM)


def _select_tile(n_samples, n_models, dim, itemsize, tile_target):
    SUB = 8                                                   # sublane granularity
    s_round = _round_up(n_samples, SUB)
    tile = max(SUB, min(_round_up(tile_target, SUB), s_round))
    # Spread samples evenly over tiles so padding waste stays < one sublane group.
    num_tiles = pl.cdiv(s_round, tile)
    tile = _round_up(pl.cdiv(s_round, num_tiles), SUB)
    # v7x megacore: give both TensorCores at least one sample tile on large inputs.
    if num_tiles < 2 and s_round >= 1024:
        tile = _round_up(pl.cdiv(s_round, 2), SUB)
    # Shrink until the working set fits a budget that is safe on v7x's 64 MiB VMEM.
    budget = 40 << 20
    while _working_set_bytes(n_models, dim, tile, itemsize) > budget and tile > SUB:
        tile = max(SUB, ((tile // 2) // SUB) * SUB)
    return tile


def orthogonal_layer_1d(x, tile_s=None):
    """x: [n_models, n_samples, dim] -> per-sample orthonormalized basis, same shape."""
    n_models, n_samples, dim = x.shape
    itemsize = jnp.dtype(x.dtype).itemsize

    if tile_s is None:
        tile_s = _default_tile_target()
    tile = _select_tile(n_samples, n_models, dim, itemsize, tile_s)

    s_pad = _round_up(n_samples, tile)
    xp = x
    if s_pad != n_samples:
        # Padded sample rows are all-zero; the where(ss > 0) guard keeps their output 0.
        xp = jnp.pad(x, ((0, 0), (0, s_pad - n_samples), (0, 0)))

    vmem_needed = _working_set_bytes(n_models, dim, tile, itemsize) + (2 << 20)
    vmem_limit = int(min(max(vmem_needed, 16 << 20), 48 << 20))

    cost = pl.CostEstimate(
        flops=int(3 * n_models * n_models * dim * n_samples),
        transcendentals=int(n_models * n_samples),
        bytes_accessed=int(2 * n_models * n_samples * dim * itemsize),
    )

    out = pl.pallas_call(
        _make_gs_kernel(n_models),
        out_shape=jax.ShapeDtypeStruct((n_models, s_pad, dim), x.dtype),
        grid_spec=pltpu.PrefetchScalarGridSpec(
            num_scalar_prefetch=0,
            grid=(s_pad // tile,),
            in_specs=[pl.BlockSpec((n_models, tile, dim), lambda s: (0, s, 0))],
            out_specs=pl.BlockSpec((n_models, tile, dim), lambda s: (0, s, 0)),
            scratch_shapes=[
                pltpu.VMEM((max(n_models - 1, 1), tile, dim), jnp.float32),
            ],
        ),
        compiler_params=pltpu.CompilerParams(
            dimension_semantics=("parallel",),
            vmem_limit_bytes=vmem_limit,
        ),
        cost_estimate=cost,
    )(xp)

    if s_pad != n_samples:
        out = out[:, :n_samples, :]
    return out


def reference(x):
    # Pure-JAX transcription of the PyTorch forward, for verification.
    x1 = jnp.transpose(x, (1, 0, 2))                          # [S, M, D]
    b0 = x1[:, 0, :] / jnp.linalg.norm(x1[:, 0, :], axis=1, keepdims=True)
    basis = b0[:, None, :]
    for i in range(1, x1.shape[1]):
        v = x1[:, i, :][:, None, :]
        w = v - jnp.matmul(jnp.matmul(v, jnp.transpose(basis, (0, 2, 1))), basis)
        wnorm = w / jnp.linalg.norm(w, axis=2, keepdims=True)
        basis = jnp.concatenate([basis, wnorm], axis=1)
    return jnp.transpose(basis, (1, 0, 2))                    # [M, S, D]


if __name__ == "__main__":
    n_models, n_samples, dim = 4, 16, 32
    key = jax.random.PRNGKey(0)
    x = jax.random.normal(key, (n_models, n_samples, dim), dtype=jnp.float32)

    out = orthogonal_layer_1d(x)
    out = jax.block_until_ready(out)

    ref = reference(x)
    assert out.shape == (n_models, n_samples, dim)
    assert bool(jnp.allclose(out, ref, atol=1e-5, rtol=1e-5)), float(
        jnp.max(jnp.abs(out - ref)))

    print("KERNEL_OK")
</pallas_src>

<mosaic_0001>
module attributes {stable_mosaic.version = 11 : i64} {
  func.func @kernel(%arg0: i32, %arg1: memref<4x16x32xf32, #tpu.memory_space<vmem>>, %arg2: memref<4x16x32xf32, #tpu.memory_space<vmem>>, %arg3: memref<3x16x32xf32, #tpu.memory_space<vmem>>) attributes {dimension_semantics = [#tpu.dimension_semantics<parallel>], iteration_bounds = array<i64: 1>, scalar_prefetch = 0 : i64, scratch_operands = 1 : i64, tpu.core_type = #tpu.core_type<tc>, window_params = [{transform_indices = @transform_0, window_bounds = array<i64: 4, 16, 32>}, {transform_indices = @transform_1, window_bounds = array<i64: 4, 16, 32>}]} {
    %c0 = arith.constant 0 : index
    %c0_0 = arith.constant 0 : index
    %c0_1 = arith.constant 0 : index
    %0 = vector.load %arg1[%c0, %c0_0, %c0_1] : memref<4x16x32xf32, #tpu.memory_space<vmem>>, vector<1x16x32xf32>
    %1 = vector.shape_cast %0 : vector<1x16x32xf32> to vector<16x32xf32>
    %2 = arith.mulf %1, %1 : vector<16x32xf32>
    %cst = arith.constant dense<0.000000e+00> : vector<16xf32>
    %3 = vector.multi_reduction <add>, %2, %cst [1] : vector<16x32xf32> to vector<16xf32>
    %4 = vector.shape_cast %3 : vector<16xf32> to vector<16x1xf32>
    %cst_2 = arith.constant 0.000000e+00 : f32
    %5 = vector.broadcast %cst_2 : f32 to vector<16x1xf32>
    %6 = arith.cmpf ogt, %4, %5 : vector<16x1xf32>
    %7 = math.rsqrt %4 : vector<16x1xf32>
    %cst_3 = arith.constant 0.000000e+00 : f32
    %8 = vector.broadcast %cst_3 : f32 to vector<16x1xf32>
    %9 = arith.select %6, %7, %8 : vector<16x1xi1>, vector<16x1xf32>
    %10 = vector.broadcast %9 : vector<16x1xf32> to vector<16x32xf32>
    %11 = arith.mulf %1, %10 : vector<16x32xf32>
    %c0_4 = arith.constant 0 : index
    %c0_5 = arith.constant 0 : index
    %c0_6 = arith.constant 0 : index
    %12 = vector.load %arg2[%c0_4, %c0_5, %c0_6] : memref<4x16x32xf32, #tpu.memory_space<vmem>>, vector<1x16x32xf32>
    %13 = vector.shape_cast %12 : vector<1x16x32xf32> to vector<16x32xf32>
    %14 = vector.shape_cast %11 : vector<16x32xf32> to vector<1x16x32xf32>
    tpu.vector_store %arg2[%c0_4, %c0_5, %c0_6], %14 {strides = array<i32>} : memref<4x16x32xf32, #tpu.memory_space<vmem>>, vector<1x16x32xf32>,
    %c0_7 = arith.constant 0 : index
    %c0_8 = arith.constant 0 : index
    %c0_9 = arith.constant 0 : index
    %15 = vector.load %arg3[%c0_7, %c0_8, %c0_9] : memref<3x16x32xf32, #tpu.memory_space<vmem>>, vector<1x16x32xf32>
    %16 = vector.shape_cast %15 : vector<1x16x32xf32> to vector<16x32xf32>
    %17 = vector.shape_cast %11 : vector<16x32xf32> to vector<1x16x32xf32>
    tpu.vector_store %arg3[%c0_7, %c0_8, %c0_9], %17 {strides = array<i32>} : memref<3x16x32xf32, #tpu.memory_space<vmem>>, vector<1x16x32xf32>,
    %c1 = arith.constant 1 : index
    %c0_10 = arith.constant 0 : index
    %c0_11 = arith.constant 0 : index
    %18 = vector.load %arg1[%c1, %c0_10, %c0_11] : memref<4x16x32xf32, #tpu.memory_space<vmem>>, vector<1x16x32xf32>
    %19 = vector.shape_cast %18 : vector<1x16x32xf32> to vector<16x32xf32>
    %c0_12 = arith.constant 0 : index
    %c0_13 = arith.constant 0 : index
    %c0_14 = arith.constant 0 : index
    %20 = vector.load %arg3[%c0_12, %c0_13, %c0_14] : memref<3x16x32xf32, #tpu.memory_space<vmem>>, vector<1x16x32xf32>
    %21 = vector.shape_cast %19 : vector<16x32xf32> to vector<1x16x32xf32>
    %22 = arith.mulf %21, %20 : vector<1x16x32xf32>
    %cst_15 = arith.constant dense<0.000000e+00> : vector<1x16xf32>
    %23 = vector.multi_reduction <add>, %22, %cst_15 [2] : vector<1x16x32xf32> to vector<1x16xf32>
    %24 = vector.shape_cast %23 : vector<1x16xf32> to vector<1x16x1xf32>
    %25 = vector.broadcast %24 : vector<1x16x1xf32> to vector<1x16x32xf32>
    %26 = arith.mulf %25, %20 : vector<1x16x32xf32>
    %cst_16 = arith.constant dense<0.000000e+00> : vector<16x32xf32>
    %27 = vector.multi_reduction <add>, %26, %cst_16 [0] : vector<1x16x32xf32> to vector<16x32xf32>
    %28 = arith.subf %19, %27 : vector<16x32xf32>
    %29 = arith.mulf %28, %28 : vector<16x32xf32>
    %cst_17 = arith.constant dense<0.000000e+00> : vector<16xf32>
    %30 = vector.multi_reduction <add>, %29, %cst_17 [1] : vector<16x32xf32> to vector<16xf32>
    %31 = vector.shape_cast %30 : vector<16xf32> to vector<16x1xf32>
    %cst_18 = arith.constant 0.000000e+00 : f32
    %32 = vector.broadcast %cst_18 : f32 to vector<16x1xf32>
    %33 = arith.cmpf ogt, %31, %32 : vector<16x1xf32>
    %34 = math.rsqrt %31 : vector<16x1xf32>
    %cst_19 = arith.constant 0.000000e+00 : f32
    %35 = vector.broadcast %cst_19 : f32 to vector<16x1xf32>
    %36 = arith.select %33, %34, %35 : vector<16x1xi1>, vector<16x1xf32>
    %37 = vector.broadcast %36 : vector<16x1xf32> to vector<16x32xf32>
    %38 = arith.mulf %28, %37 : vector<16x32xf32>
    %c1_20 = arith.constant 1 : index
    %c0_21 = arith.constant 0 : index
    %c0_22 = arith.constant 0 : index
    %39 = vector.load %arg2[%c1_20, %c0_21, %c0_22] : memref<4x16x32xf32, #tpu.memory_space<vmem>>, vector<1x16x32xf32>
    %40 = vector.shape_cast %39 : vector<1x16x32xf32> to vector<16x32xf32>
    %41 = vector.shape_cast %38 : vector<16x32xf32> to vector<1x16x32xf32>
    tpu.vector_store %arg2[%c1_20, %c0_21, %c0_22], %41 {strides = array<i32>} : memref<4x16x32xf32, #tpu.memory_space<vmem>>, vector<1x16x32xf32>,
    %c1_23 = arith.constant 1 : index
    %c0_24 = arith.constant 0 : index
    %c0_25 = arith.constant 0 : index
    %42 = vector.load %arg3[%c1_23, %c0_24, %c0_25] : memref<3x16x32xf32, #tpu.memory_space<vmem>>, vector<1x16x32xf32>
    %43 = vector.shape_cast %42 : vector<1x16x32xf32> to vector<16x32xf32>
    %44 = vector.shape_cast %38 : vector<16x32xf32> to vector<1x16x32xf32>
    tpu.vector_store %arg3[%c1_23, %c0_24, %c0_25], %44 {strides = array<i32>} : memref<3x16x32xf32, #tpu.memory_space<vmem>>, vector<1x16x32xf32>,
    %c2 = arith.constant 2 : index
    %c0_26 = arith.constant 0 : index
    %c0_27 = arith.constant 0 : index
    %45 = vector.load %arg1[%c2, %c0_26, %c0_27] : memref<4x16x32xf32, #tpu.memory_space<vmem>>, vector<1x16x32xf32>
    %46 = vector.shape_cast %45 : vector<1x16x32xf32> to vector<16x32xf32>
    %c0_28 = arith.constant 0 : index
    %c0_29 = arith.constant 0 : index
    %c0_30 = arith.constant 0 : index
    %47 = vector.load %arg3[%c0_28, %c0_29, %c0_30] : memref<3x16x32xf32, #tpu.memory_space<vmem>>, vector<2x16x32xf32>
    %48 = vector.shape_cast %46 : vector<16x32xf32> to vector<1x16x32xf32>
    %49 = vector.broadcast %48 : vector<1x16x32xf32> to vector<2x16x32xf32>
    %50 = arith.mulf %49, %47 : vector<2x16x32xf32>
    %cst_31 = arith.constant dense<0.000000e+00> : vector<2x16xf32>
    %51 = vector.multi_reduction <add>, %50, %cst_31 [2] : vector<2x16x32xf32> to vector<2x16xf32>
    %52 = vector.shape_cast %51 : vector<2x16xf32> to vector<2x16x1xf32>
    %53 = vector.broadcast %52 : vector<2x16x1xf32> to vector<2x16x32xf32>
    %54 = arith.mulf %53, %47 : vector<2x16x32xf32>
    %cst_32 = arith.constant dense<0.000000e+00> : vector<16x32xf32>
    %55 = vector.multi_reduction <add>, %54, %cst_32 [0] : vector<2x16x32xf32> to vector<16x32xf32>
    %56 = arith.subf %46, %55 : vector<16x32xf32>
    %57 = arith.mulf %56, %56 : vector<16x32xf32>
    %cst_33 = arith.constant dense<0.000000e+00> : vector<16xf32>
    %58 = vector.multi_reduction <add>, %57, %cst_33 [1] : vector<16x32xf32> to vector<16xf32>
    %59 = vector.shape_cast %58 : vector<16xf32> to vector<16x1xf32>
    %cst_34 = arith.constant 0.000000e+00 : f32
    %60 = vector.broadcast %cst_34 : f32 to vector<16x1xf32>
    %61 = arith.cmpf ogt, %59, %60 : vector<16x1xf32>
    %62 = math.rsqrt %59 : vector<16x1xf32>
    %cst_35 = arith.constant 0.000000e+00 : f32
    %63 = vector.broadcast %cst_35 : f32 to vector<16x1xf32>
    %64 = arith.select %61, %62, %63 : vector<16x1xi1>, vector<16x1xf32>
    %65 = vector.broadcast %64 : vector<16x1xf32> to vector<16x32xf32>
    %66 = arith.mulf %56, %65 : vector<16x32xf32>
    %c2_36 = arith.constant 2 : index
    %c0_37 = arith.constant 0 : index
    %c0_38 = arith.constant 0 : index
    %67 = vector.load %arg2[%c2_36, %c0_37, %c0_38] : memref<4x16x32xf32, #tpu.memory_space<vmem>>, vector<1x16x32xf32>
    %68 = vector.shape_cast %67 : vector<1x16x32xf32> to vector<16x32xf32>
    %69 = vector.shape_cast %66 : vector<16x32xf32> to vector<1x16x32xf32>
    tpu.vector_store %arg2[%c2_36, %c0_37, %c0_38], %69 {strides = array<i32>} : memref<4x16x32xf32, #tpu.memory_space<vmem>>, vector<1x16x32xf32>,
    %c2_39 = arith.constant 2 : index
    %c0_40 = arith.constant 0 : index
    %c0_41 = arith.constant 0 : index
    %70 = vector.load %arg3[%c2_39, %c0_40, %c0_41] : memref<3x16x32xf32, #tpu.memory_space<vmem>>, vector<1x16x32xf32>
    %71 = vector.shape_cast %70 : vector<1x16x32xf32> to vector<16x32xf32>
    %72 = vector.shape_cast %66 : vector<16x32xf32> to vector<1x16x32xf32>
    tpu.vector_store %arg3[%c2_39, %c0_40, %c0_41], %72 {strides = array<i32>} : memref<3x16x32xf32, #tpu.memory_space<vmem>>, vector<1x16x32xf32>,
    %c3 = arith.constant 3 : index
    %c0_42 = arith.constant 0 : index
    %c0_43 = arith.constant 0 : index
    %73 = vector.load %arg1[%c3, %c0_42, %c0_43] : memref<4x16x32xf32, #tpu.memory_space<vmem>>, vector<1x16x32xf32>
    %74 = vector.shape_cast %73 : vector<1x16x32xf32> to vector<16x32xf32>
    %c0_44 = arith.constant 0 : index
    %c0_45 = arith.constant 0 : index
    %c0_46 = arith.constant 0 : index
    %75 = vector.load %arg3[%c0_44, %c0_45, %c0_46] : memref<3x16x32xf32, #tpu.memory_space<vmem>>, vector<3x16x32xf32>
    %76 = vector.shape_cast %74 : vector<16x32xf32> to vector<1x16x32xf32>
    %77 = vector.broadcast %76 : vector<1x16x32xf32> to vector<3x16x32xf32>
    %78 = arith.mulf %77, %75 : vector<3x16x32xf32>
    %cst_47 = arith.constant dense<0.000000e+00> : vector<3x16xf32>
    %79 = vector.multi_reduction <add>, %78, %cst_47 [2] : vector<3x16x32xf32> to vector<3x16xf32>
    %80 = vector.shape_cast %79 : vector<3x16xf32> to vector<3x16x1xf32>
    %81 = vector.broadcast %80 : vector<3x16x1xf32> to vector<3x16x32xf32>
    %82 = arith.mulf %81, %75 : vector<3x16x32xf32>
    %cst_48 = arith.constant dense<0.000000e+00> : vector<16x32xf32>
    %83 = vector.multi_reduction <add>, %82, %cst_48 [0] : vector<3x16x32xf32> to vector<16x32xf32>
    %84 = arith.subf %74, %83 : vector<16x32xf32>
    %85 = arith.mulf %84, %84 : vector<16x32xf32>
    %cst_49 = arith.constant dense<0.000000e+00> : vector<16xf32>
    %86 = vector.multi_reduction <add>, %85, %cst_49 [1] : vector<16x32xf32> to vector<16xf32>
    %87 = vector.shape_cast %86 : vector<16xf32> to vector<16x1xf32>
    %cst_50 = arith.constant 0.000000e+00 : f32
    %88 = vector.broadcast %cst_50 : f32 to vector<16x1xf32>
    %89 = arith.cmpf ogt, %87, %88 : vector<16x1xf32>
    %90 = math.rsqrt %87 : vector<16x1xf32>
    %cst_51 = arith.constant 0.000000e+00 : f32
    %91 = vector.broadcast %cst_51 : f32 to vector<16x1xf32>
    %92 = arith.select %89, %90, %91 : vector<16x1xi1>, vector<16x1xf32>
    %93 = vector.broadcast %92 : vector<16x1xf32> to vector<16x32xf32>
    %94 = arith.mulf %84, %93 : vector<16x32xf32>
    %c3_52 = arith.constant 3 : index
    %c0_53 = arith.constant 0 : index
    %c0_54 = arith.constant 0 : index
    %95 = vector.load %arg2[%c3_52, %c0_53, %c0_54] : memref<4x16x32xf32, #tpu.memory_space<vmem>>, vector<1x16x32xf32>
    %96 = vector.shape_cast %95 : vector<1x16x32xf32> to vector<16x32xf32>
    %97 = vector.shape_cast %94 : vector<16x32xf32> to vector<1x16x32xf32>
    tpu.vector_store %arg2[%c3_52, %c0_53, %c0_54], %97 {strides = array<i32>} : memref<4x16x32xf32, #tpu.memory_space<vmem>>, vector<1x16x32xf32>,
    return
  }
  func.func @transform_0(%arg0: i32) -> (i32, i32, i32) {
    %c0_i32 = arith.constant 0 : i32
    %c0_i32_0 = arith.constant 0 : i32
    %c0_i32_1 = arith.constant 0 : i32
    return %c0_i32, %arg0, %c0_i32_0 : i32, i32, i32
  }
  func.func @transform_1(%arg0: i32) -> (i32, i32, i32) {
    %c0_i32 = arith.constant 0 : i32
    %c0_i32_0 = arith.constant 0 : i32
    %c0_i32_1 = arith.constant 0 : i32
    return %c0_i32, %arg0, %c0_i32_0 : i32, i32, i32
  }
}

</mosaic_0001>

<llo_original>
// kernel: tpu_custom_call.1
$region0: #{tpu_custom_call.1}
  #allocation0 [shape = 'u32[]', space=smem, size = 0x4, offset = 0x4, fixed_abs, tag = 'smem constant byte address 0x4 - core index']
  #allocation1 [shape = 'u32[144,128]{1,0:T(1,128)}', space=vmem, size = 0x12000, scoped, tag = 'internal scratch']
  #allocation2 [shape = 'f32[3,16,32]{2,1,0:T(8,128)}', space=vmem, size = 0x6000, scoped, tag = 'scratch operand']
  %s0 = inlined_call_operand.hbm [shape: f32[4,16,32], index: 0, kind: input, shape index: {}]
  %s1 = inlined_call_operand.hbm [shape: f32[4,16,32], index: 1, kind: output, shape index: {}]
  %s2 = sld [smem:[#allocation0]]
  $region18: #{tpu_custom_call.1} parent=0
    _
  %s4 = ssub.s32 1, %s2
  %s5 = scalar_select 0, %s4, %s2
  $region1: #{tpu_custom_call.1} parent=0
    #allocation3 [shape = 'u8[32768]{0}', space=vmem, size = 0x8000, scoped, tag = 'input window, operand 0, single buffered']
    #allocation4 [shape = 's32[1]{0}', space=sflag, size = 0x4, scoped, tag = 'scoped memory for tpu_custom_call.1']
    #allocation5 [shape = 's32[1]{0}', space=sflag, size = 0x4, scoped, tag = 'scoped memory for tpu_custom_call.1']
    #allocation6 [shape = 'u8[32768]{0}', space=vmem, size = 0x8000, scoped, tag = 'output window, operand 0, single buffered']
    %6 = vsyncpa [#allocation4], 0
    %7 = vsyncpa [#allocation5], 0
    // Predicated region
    $region2: #{tpu_custom_call.1} parent=1 // pred_check
      _
    $region3: #{tpu_custom_call.1} parent=1 // pred_check_branch
      %9 = sbr.rel (0) target = $region5
    $region4: #{tpu_custom_call.1} parent=1 // pred_region
      %s11 = ssub.s32 1024, 1024
      %12 = vsyncadd [#allocation4], %s11
      %s13 = sshll.u32 [#allocation3], 4
      %s14 = int_to_ptr.vmem [resolvable:$true] %s13
      %19 = dma.hbm_to_vmem [thread:$0]  %s0, 1024, %s14, [#allocation4], 128, 128, 8
    $region5: #{tpu_custom_call.1} parent=1 // pred_fallthru
      _
    // Predicated region
    $region6: #{tpu_custom_call.1} parent=1 // pred_check
      _
    $region7: #{tpu_custom_call.1} parent=1 // pred_check_branch
      %21 = sbr.rel (0) target = $region9
    $region8: #{tpu_custom_call.1} parent=1 // pred_region
      %22 = dma.done [#allocation4], 1024
    $region9: #{tpu_custom_call.1} parent=1 // pred_fallthru
      _
    %v23 = vld [vmem:[#allocation3] sm:$0xff]
    %v24 = vld [vmem:[#allocation3 + $0x8] sm:$0xff]
    %v25 = vmul.f32 %v23, %v23
    %v26 = vmul.f32 %v24, %v24
    %vm27 = vcmask 261120
    %v28 = vsel %vm27, %v25, 0.0
    %29 = vadd.xlane.f32.xlu0 %v28
    %v30 = vpop.xlane.xlu0 %29
    %v31 = vsel %vm27, %v26, 0.0
    %32 = vadd.xlane.f32.xlu0 %v31
    %v33 = vpop.xlane.xlu0 %32
    %vm34 = vcmp.gt.f32.partialorder %v30, 0.0
    %vm35 = vcmp.gt.f32.partialorder %v33, 0.0
    %v36 = vrsqrt.pop %v30
    %v37 = vrsqrt.pop %v33
    %v38 = vsel %vm34, %v36, 0.0
    %v39 = vsel %vm35, %v37, 0.0
    %v40 = vmul.f32 %v23, %v38
    %v41 = vmul.f32 %v24, %v39
    %42 = vst.msk [vmem:[#allocation6] sm:$0xff] %vm27, %v40
    %43 = vst.msk [vmem:[#allocation6 + $0x8] sm:$0xff] %vm27, %v41
    %44 = vst.msk [vmem:[#allocation2] sm:$0xff] %vm27, %v40
    %45 = vst.msk [vmem:[#allocation2 + $0x8] sm:$0xff] %vm27, %v41
    %s46 = scalar_lea.vmem [#allocation3], 16
    %v47 = vld [vmem:[%s46] sm:$0xff]
    %v48 = vld [vmem:[%s46 + $0x8] sm:$0xff]
    %v49 = vld [vmem:[#allocation2] sm:$0xff]
    %v50 = vld [vmem:[#allocation2 + $0x8] sm:$0xff]
    %v51 = vmul.f32 %v47, %v49
    %v52 = vmul.f32 %v48, %v50
    %v53 = vsel %vm27, %v51, 0.0
    %54 = vadd.xlane.f32.xlu0 %v53
    %v55 = vpop.xlane.xlu0 %54
    %v56 = vsel %vm27, %v52, 0.0
    %57 = vadd.xlane.f32.xlu0 %v56
    %v58 = vpop.xlane.xlu0 %57
    %v59 = vmul.f32 %v55, %v49
    %v60 = vmul.f32 %v58, %v50
    %v61 = vadd.f32 %v59, 0.0
    %v62 = vadd.f32 %v60, 0.0
    %v63 = vsub.f32 %v47, %v61
    %v64 = vsub.f32 %v48, %v62
    %v65 = vmul.f32 %v63, %v63
    %v66 = vmul.f32 %v64, %v64
    %v67 = vsel %vm27, %v65, 0.0
    %68 = vadd.xlane.f32.xlu0 %v67
    %v69 = vpop.xlane.xlu0 %68
    %v70 = vsel %vm27, %v66, 0.0
    %71 = vadd.xlane.f32.xlu0 %v70
    %v72 = vpop.xlane.xlu0 %71
    %vm73 = vcmp.gt.f32.partialorder %v69, 0.0
    %vm74 = vcmp.gt.f32.partialorder %v72, 0.0
    %v75 = vrsqrt.pop %v69
    %v76 = vrsqrt.pop %v72
    %v77 = vsel %vm73, %v75, 0.0
    %v78 = vsel %vm74, %v76, 0.0
    %v79 = vmul.f32 %v63, %v77
    %v80 = vmul.f32 %v64, %v78
    %s81 = scalar_lea.vmem [#allocation6], 16
    %82 = vst.msk [vmem:[%s81] sm:$0xff] %vm27, %v79
    %83 = vst.msk [vmem:[%s81 + $0x8] sm:$0xff] %vm27, %v80
    %s84 = scalar_lea.vmem [#allocation2], 16
    %85 = vst.msk [vmem:[%s84] sm:$0xff] %vm27, %v79
    %86 = vst.msk [vmem:[%s84 + $0x8] sm:$0xff] %vm27, %v80
    %s87 = scalar_lea.vmem [#allocation3], 32
    %v88 = vld [vmem:[%s87] sm:$0xff]
    %v89 = vld [vmem:[%s87 + $0x8] sm:$0xff]
    %v90 = vld [vmem:[#allocation2] sm:$0xff]
    %v91 = vld [vmem:[#allocation2 + $0x8] sm:$0xff]
    %v92 = vld [vmem:[#allocation2 + $0x10] sm:$0xff]
    %v93 = vld [vmem:[#allocation2 + $0x18] sm:$0xff]
    %v94 = vmul.f32 %v88, %v90
    %v95 = vmul.f32 %v89, %v91
    %v96 = vmul.f32 %v88, %v92
    %v97 = vmul.f32 %v89, %v93
    %v98 = vsel %vm27, %v94, 0.0
    %99 = vadd.xlane.f32.xlu0 %v98
    %v100 = vpop.xlane.xlu0 %99
    %v101 = vsel %vm27, %v95, 0.0
    %102 = vadd.xlane.f32.xlu0 %v101
    %v103 = vpop.xlane.xlu0 %102
    %v104 = vsel %vm27, %v96, 0.0
    %105 = vadd.xlane.f32.xlu0 %v104
    %v106 = vpop.xlane.xlu0 %105
    %v107 = vsel %vm27, %v97, 0.0
    %108 = vadd.xlane.f32.xlu0 %v107
    %v109 = vpop.xlane.xlu0 %108
    %v110 = vmul.f32 %v100, %v90
    %v111 = vmul.f32 %v103, %v91
    %v112 = vmul.f32 %v106, %v92
    %v113 = vmul.f32 %v109, %v93
    %v114 = vsel %vm27, %v110, 0.0
    %v115 = vsel %vm27, %v112, 0.0
    %v116 = vadd.f32 %v114, %v115
    %v117 = vsel %vm27, %v111, 0.0
    %v118 = vsel %vm27, %v113, 0.0
    %v119 = vadd.f32 %v117, %v118
    %v120 = vsub.f32 %v88, %v116
    %v121 = vsub.f32 %v89, %v119
    %v122 = vmul.f32 %v120, %v120
    %v123 = vmul.f32 %v121, %v121
    %v124 = vsel %vm27, %v122, 0.0
    %125 = vadd.xlane.f32.xlu0 %v124
    %v126 = vpop.xlane.xlu0 %125
    %v127 = vsel %vm27, %v123, 0.0
    %128 = vadd.xlane.f32.xlu0 %v127
    %v129 = vpop.xlane.xlu0 %128
    %vm130 = vcmp.gt.f32.partialorder %v126, 0.0
    %vm131 = vcmp.gt.f32.partialorder %v129, 0.0
    %v132 = vrsqrt.pop %v126
    %v133 = vrsqrt.pop %v129
    %v134 = vsel %vm130, %v132, 0.0
    %v135 = vsel %vm131, %v133, 0.0
    %v136 = vmul.f32 %v120, %v134
    %v137 = vmul.f32 %v121, %v135
    %s138 = scalar_lea.vmem [#allocation6], 32
    %139 = vst.msk [vmem:[%s138] sm:$0xff] %vm27, %v136
    %140 = vst.msk [vmem:[%s138 + $0x8] sm:$0xff] %vm27, %v137
    %s141 = scalar_lea.vmem [#allocation2], 32
    %142 = vst.msk [vmem:[%s141] sm:$0xff] %vm27, %v136
    %143 = vst.msk [vmem:[%s141 + $0x8] sm:$0xff] %vm27, %v137
    %s144 = scalar_lea.vmem [#allocation3], 48
    %v145 = vld [vmem:[%s144] sm:$0xff]
    %v146 = vld [vmem:[%s144 + $0x8] sm:$0xff]
    %v147 = vld [vmem:[#allocation2] sm:$0xff]
    %v148 = vld [vmem:[#allocation2 + $0x8] sm:$0xff]
    %v149 = vld [vmem:[#allocation2 + $0x10] sm:$0xff]
    %v150 = vld [vmem:[#allocation2 + $0x18] sm:$0xff]
    %v151 = vld [vmem:[#allocation2 + $0x20] sm:$0xff]
    %v152 = vld [vmem:[#allocation2 + $0x28] sm:$0xff]
    %v153 = vmul.f32 %v145, %v147
    %v154 = vmul.f32 %v146, %v148
    %v155 = vmul.f32 %v145, %v149
    %v156 = vmul.f32 %v146, %v150
    %v157 = vmul.f32 %v145, %v151
    %v158 = vmul.f32 %v146, %v152
    %v159 = vsel %vm27, %v153, 0.0
    %160 = vadd.xlane.f32.xlu0 %v159
    %v161 = vpop.xlane.xlu0 %160
    %v162 = vsel %vm27, %v154, 0.0
    %163 = vadd.xlane.f32.xlu0 %v162
    %v164 = vpop.xlane.xlu0 %163
    %v165 = vsel %vm27, %v155, 0.0
    %166 = vadd.xlane.f32.xlu0 %v165
    %v167 = vpop.xlane.xlu0 %166
    %v168 = vsel %vm27, %v156, 0.0
    %169 = vadd.xlane.f32.xlu0 %v168
    %v170 = vpop.xlane.xlu0 %169
    %v171 = vsel %vm27, %v157, 0.0
    %172 = vadd.xlane.f32.xlu0 %v171
    %v173 = vpop.xlane.xlu0 %172
    %v174 = vsel %vm27, %v158, 0.0
    %175 = vadd.xlane.f32.xlu0 %v174
    %v176 = vpop.xlane.xlu0 %175
    %v177 = vmul.f32 %v161, %v147
    %v178 = vmul.f32 %v164, %v148
    %v179 = vmul.f32 %v167, %v149
    %v180 = vmul.f32 %v170, %v150
    %v181 = vmul.f32 %v173, %v151
    %v182 = vmul.f32 %v176, %v152
    %v183 = vsel %vm27, %v177, 0.0
    %v184 = vsel %vm27, %v179, 0.0
    %v185 = vadd.f32 %v183, %v184
    %v186 = vsel %vm27, %v181, 0.0
    %v187 = vadd.f32 %v185, %v186
    %v188 = vsel %vm27, %v178, 0.0
    %v189 = vsel %vm27, %v180, 0.0
    %v190 = vadd.f32 %v188, %v189
    %v191 = vsel %vm27, %v182, 0.0
    %v192 = vadd.f32 %v190, %v191
    %v193 = vsub.f32 %v145, %v187
    %v194 = vsub.f32 %v146, %v192
    %v195 = vmul.f32 %v193, %v193
    %v196 = vmul.f32 %v194, %v194
    %v197 = vsel %vm27, %v195, 0.0
    %198 = vadd.xlane.f32.xlu0 %v197
    %v199 = vpop.xlane.xlu0 %198
    %v200 = vsel %vm27, %v196, 0.0
    %201 = vadd.xlane.f32.xlu0 %v200
    %v202 = vpop.xlane.xlu0 %201
    %vm203 = vcmp.gt.f32.partialorder %v199, 0.0
    %vm204 = vcmp.gt.f32.partialorder %v202, 0.0
    %v205 = vrsqrt.pop %v199
    %v206 = vrsqrt.pop %v202
    %v207 = vsel %vm203, %v205, 0.0
    %v208 = vsel %vm204, %v206, 0.0
    %v209 = vmul.f32 %v193, %v207
    %v210 = vmul.f32 %v194, %v208
    %s211 = scalar_lea.vmem [#allocation6], 48
    %212 = vst.msk [vmem:[%s211] sm:$0xff] %vm27, %v209
    %213 = vst.msk [vmem:[%s211 + $0x8] sm:$0xff] %vm27, %v210
    // Predicated region
    $region10: #{tpu_custom_call.1} parent=1 // pred_check
      _
    $region11: #{tpu_custom_call.1} parent=1 // pred_check_branch
      %215 = sbr.rel (0) target = $region13
    $region12: #{tpu_custom_call.1} parent=1 // pred_region
      %s217 = ssub.s32 1024, 1024
      %218 = vsyncadd [#allocation5], %s217
      %s219 = sshll.u32 [#allocation6], 4
      %s220 = int_to_ptr.vmem [resolvable:$true] %s219
      %225 = dma.vmem_to_hbm [thread:$0]  %s220, 1024, %s1, [#allocation5], 128, 128, 8
    $region13: #{tpu_custom_call.1} parent=1 // pred_fallthru
      _
    // Predicated region
    $region14: #{tpu_custom_call.1} parent=1 // pred_check
      _
    $region15: #{tpu_custom_call.1} parent=1 // pred_check_branch
      %227 = sbr.rel (0) target = $region17
    $region16: #{tpu_custom_call.1} parent=1 // pred_region
      %228 = dma.done [#allocation5], 1024
    $region17: #{tpu_custom_call.1} parent=1 // pred_fallthru
      _
    %229 = vsyncpa [#allocation4], 1
    %230 = vsyncpa [#allocation5], 1

</llo_original>
